<compile_context>
chip_gen: v7x
topology: tpu7x:2x2x1
jax: 0.10.0
libtpu: 0.0.40
codegen_flags: <defaults>
</compile_context>

<pallas_src>
import math

import jax
import jax.numpy as jnp
from jax.experimental import pallas as pl
from jax.experimental.pallas import tpu as pltpu

THRESHOLD = 20.0
CLAMP_MAX = math.log(100000.0)

LANE = 128
TARGET_BLOCK_BYTES = 1 << 20        # ~1 MiB x-block: ~85% of HBM roofline


def scaled_softplus_kernel(x_ref, log_beta_ref, out_ref):
    x = x_ref[...].astype(jnp.float32)                       # (TB, C)
    beta = jnp.exp(log_beta_ref[...].astype(jnp.float32))    # (1, C)
    inv_beta = 1.0 / beta                                     # hoisted to the (1, C) row
    beta_x = beta * x
    soft = jnp.log1p(jnp.exp(jnp.minimum(beta_x, CLAMP_MAX))) * inv_beta
    out_ref[...] = jnp.where(beta_x <= THRESHOLD, soft, x).astype(out_ref.dtype)


def _round_up(a, b):
    return ((a + b - 1) // b) * b


def scaled_softplus(x, log_beta):
    """x: [..., num_marks]; log_beta: [num_marks]."""
    orig_shape = x.shape
    M = orig_shape[-1]
    assert log_beta.shape == (M,)

    rows = 1
    for d in orig_shape[:-1]:
        rows *= d

    dtype = x.dtype
    itemsize = jnp.dtype(dtype).itemsize
    row_align = max(8, 32 // itemsize)          # 8 for f32, 16 for bf16 tiles

    x2 = x.reshape(rows, M)
    lb = log_beta.astype(jnp.float32).reshape(1, M)

    # ---- lane-dense last dim -------------------------------------------
    if M % LANE == 0:
        p, C, pad_lanes = 1, M, 0
    elif LANE % M == 0:
        # pack p consecutive mark-vectors per row; widen up to 512 lanes when
        # there are enough rows (longer contiguous DMA runs).
        p = LANE // M
        while p * 2 * M <= 512 and rows >= p * 2 * row_align:
            p *= 2
        C, pad_lanes = p * M, 0
    else:
        # pad the mark dim to a multiple of 128; padded lanes use log_beta = 0
        # (beta = 1) so the unused `soft` branch stays finite (no inf/NaN).
        p = 1
        C = _round_up(M, LANE)
        pad_lanes = C - M

    if pad_lanes:
        x2 = jnp.pad(x2, ((0, 0), (0, pad_lanes)))
        lb = jnp.pad(lb, ((0, 0), (0, pad_lanes)))
    if p > 1:
        rows_packed = _round_up(rows, p)
        if rows_packed != rows:
            x2 = jnp.pad(x2, ((0, rows_packed - rows), (0, 0)))
        x2 = x2.reshape(rows_packed // p, C)
        lb = jnp.tile(lb, (1, p))

    R = x2.shape[0]

    # ---- VMEM-budgeted row blocks, many grid steps ----------------------
    tb_budget = max(row_align,
                    (TARGET_BLOCK_BYTES // (C * itemsize)) // row_align * row_align)
    TB = min(tb_budget, _round_up(R, row_align))
    R_pad = _round_up(R, TB)
    if R_pad != R:
        x2 = jnp.pad(x2, ((0, R_pad - R), (0, 0)))
    grid = (R_pad // TB,)

    out2 = pl.pallas_call(
        scaled_softplus_kernel,
        out_shape=jax.ShapeDtypeStruct((R_pad, C), dtype),
        grid_spec=pltpu.PrefetchScalarGridSpec(
            num_scalar_prefetch=0,
            grid=grid,
            in_specs=[
                pl.BlockSpec((TB, C), lambda i: (i, 0)),   # x rows
                pl.BlockSpec((1, C), lambda i: (0, 0)),    # (tiled/padded) log_beta
            ],
            out_specs=pl.BlockSpec((TB, C), lambda i: (i, 0)),
        ),
        compiler_params=pltpu.CompilerParams(
            dimension_semantics=("parallel",)),
    )(x2, lb)

    # ---- undo padding / packing ------------------------------------------
    out2 = out2[:R]
    if p > 1:
        out2 = out2.reshape(R * p, M)[:rows]
    elif pad_lanes:
        out2 = out2[:, :M]
    return out2.reshape(orig_shape)


def scaled_softplus_ref(x, log_beta):
    beta = jnp.exp(log_beta)
    beta_x = beta * x
    soft = jnp.log1p(jnp.exp(jnp.minimum(beta_x, CLAMP_MAX))) / beta
    return jnp.where(beta_x <= THRESHOLD, soft, x)


if __name__ == "__main__":
    key = jax.random.PRNGKey(0)
    k1, k2, k3, k4 = jax.random.split(key, 4)

    # Case 1: num_marks divides 128 -> lane-packed path.
    B, S, NUM_MARKS = 4, 16, 32
    # scale x so the clamp branch and the >threshold pass-through are both hit
    x = jax.random.normal(k1, (B, S, NUM_MARKS), jnp.float32) * 10.0
    log_beta = 0.1 * jax.random.normal(k2, (NUM_MARKS,), jnp.float32)

    out = scaled_softplus(x, log_beta)
    jax.block_until_ready(out)
    assert out.shape == (B, S, NUM_MARKS)
    ref = scaled_softplus_ref(x, log_beta)
    err = float(jnp.max(jnp.abs(out - ref)))
    assert jnp.allclose(out, ref, atol=1e-5, rtol=1e-5), err

    # Case 2: awkward shape (marks don't divide 128, odd row count) -> padded path.
    x2 = jax.random.normal(k3, (3, 5, 50), jnp.float32) * 10.0
    lb2 = 0.1 * jax.random.normal(k4, (50,), jnp.float32)
    out2 = scaled_softplus(x2, lb2)
    jax.block_until_ready(out2)
    assert out2.shape == (3, 5, 50)
    ref2 = scaled_softplus_ref(x2, lb2)
    err2 = float(jnp.max(jnp.abs(out2 - ref2)))
    assert jnp.allclose(out2, ref2, atol=1e-5, rtol=1e-5), err2

    print("KERNEL_OK")
</pallas_src>

<mosaic_0001>
module attributes {stable_mosaic.version = 11 : i64} {
  func.func @scaled_softplus_kernel(%arg0: i32, %arg1: memref<8x256xf32, #tpu.memory_space<vmem>>, %arg2: memref<1x256xf32, #tpu.memory_space<vmem>>, %arg3: memref<8x256xf32, #tpu.memory_space<vmem>>) attributes {dimension_semantics = [#tpu.dimension_semantics<parallel>], iteration_bounds = array<i64: 1>, scalar_prefetch = 0 : i64, scratch_operands = 0 : i64, tpu.core_type = #tpu.core_type<tc>, window_params = [{transform_indices = @transform_0, window_bounds = array<i64: 8, 256>}, {pipeline_mode = #tpu.pipeline_mode<synchronous>, transform_indices = @transform_1, window_bounds = array<i64: 1, 256>}, {transform_indices = @transform_2, window_bounds = array<i64: 8, 256>}]} {
    %c0 = arith.constant 0 : index
    %c0_0 = arith.constant 0 : index
    %0 = vector.load %arg1[%c0, %c0_0] : memref<8x256xf32, #tpu.memory_space<vmem>>, vector<8x256xf32>
    %c0_1 = arith.constant 0 : index
    %c0_2 = arith.constant 0 : index
    %1 = vector.load %arg2[%c0_1, %c0_2] : memref<1x256xf32, #tpu.memory_space<vmem>>, vector<1x256xf32>
    %2 = math.exp %1 : vector<1x256xf32>
    %cst = arith.constant 1.000000e+00 : f32
    %3 = vector.broadcast %cst : f32 to vector<1x256xf32>
    %4 = arith.divf %3, %2 : vector<1x256xf32>
    %5 = vector.broadcast %2 : vector<1x256xf32> to vector<8x256xf32>
    %6 = arith.mulf %5, %0 : vector<8x256xf32>
    %cst_3 = arith.constant 11.5129251 : f32
    %7 = vector.broadcast %cst_3 : f32 to vector<8x256xf32>
    %8 = arith.minimumf %6, %7 : vector<8x256xf32>
    %9 = math.exp %8 : vector<8x256xf32>
    %10 = math.log1p %9 : vector<8x256xf32>
    %11 = vector.broadcast %4 : vector<1x256xf32> to vector<8x256xf32>
    %12 = arith.mulf %10, %11 : vector<8x256xf32>
    %cst_4 = arith.constant 2.000000e+01 : f32
    %13 = vector.broadcast %cst_4 : f32 to vector<8x256xf32>
    %14 = arith.cmpf ole, %6, %13 : vector<8x256xf32>
    %15 = arith.select %14, %12, %0 : vector<8x256xi1>, vector<8x256xf32>
    %c0_5 = arith.constant 0 : index
    %c0_6 = arith.constant 0 : index
    %16 = vector.load %arg3[%c0_5, %c0_6] : memref<8x256xf32, #tpu.memory_space<vmem>>, vector<8x256xf32>
    tpu.vector_store %arg3[%c0_5, %c0_6], %15 {strides = array<i32>} : memref<8x256xf32, #tpu.memory_space<vmem>>, vector<8x256xf32>,
    return
  }
  func.func @transform_0(%arg0: i32) -> (i32, i32) {
    %c0_i32 = arith.constant 0 : i32
    %c0_i32_0 = arith.constant 0 : i32
    return %arg0, %c0_i32 : i32, i32
  }
  func.func @transform_1(%arg0: i32) -> (i32, i32) {
    %c0_i32 = arith.constant 0 : i32
    %c0_i32_0 = arith.constant 0 : i32
    %c0_i32_1 = arith.constant 0 : i32
    return %c0_i32, %c0_i32_0 : i32, i32
  }
  func.func @transform_2(%arg0: i32) -> (i32, i32) {
    %c0_i32 = arith.constant 0 : i32
    %c0_i32_0 = arith.constant 0 : i32
    return %arg0, %c0_i32 : i32, i32
  }
}

</mosaic_0001>

<llo_original>
// kernel: tpu_custom_call.1
$region0: #{tpu_custom_call.1}
  #allocation0 [shape = 'u32[]', space=smem, size = 0x4, offset = 0x4, fixed_abs, tag = 'smem constant byte address 0x4 - core index']
  #allocation1 [shape = 'u32[144,128]{1,0:T(1,128)}', space=vmem, size = 0x12000, scoped, tag = 'internal scratch']
  %s0 = inlined_call_operand.hbm [shape: f32[8,256], index: 0, kind: input, shape index: {}]
  %s1 = inlined_call_operand.vmem [shape: f32[1,256], index: 1, kind: input, shape index: {}]
  %s2 = inlined_call_operand.hbm [shape: f32[8,256], index: 2, kind: output, shape index: {}]
  %s3 = sld [smem:[#allocation0]]
  $region22: #{tpu_custom_call.1} parent=0
    _
  %s5 = ssub.s32 1, %s3
  %s6 = scalar_select 0, %s5, %s3
  $region1: #{tpu_custom_call.1} parent=0
    #allocation2 [shape = 'u8[8192]{0}', space=vmem, size = 0x2000, scoped, tag = 'input window, operand 0, single buffered']
    #allocation3 [shape = 's32[1]{0}', space=sflag, size = 0x4, scoped, tag = 'scoped memory for tpu_custom_call.1']
    #allocation4 [shape = 's32[1]{0}', space=sflag, size = 0x4, scoped, tag = 'scoped memory for tpu_custom_call.1']
    #allocation5 [shape = 'u8[8192]{0}', space=vmem, size = 0x2000, scoped, tag = 'output window, operand 0, single buffered']
    %7 = vsyncpa [#allocation3], 0
    %8 = vsyncpa [#allocation4], 0
    // Predicated region
    $region2: #{tpu_custom_call.1} parent=1 // pred_check
      _
    $region3: #{tpu_custom_call.1} parent=1 // pred_check_branch
      %10 = sbr.rel (0) target = $region5
    $region4: #{tpu_custom_call.1} parent=1 // pred_region
      %s12 = ssub.s32 256, 256
      %13 = vsyncadd [#allocation3], %s12
      %s15 = sshll.u32 [#allocation2], 4
      %s16 = int_to_ptr.vmem [resolvable:$true] %s15
      %18 = dma.hbm_to_vmem [thread:$0]  %s0, 256, %s16, [#allocation3]
    $region5: #{tpu_custom_call.1} parent=1 // pred_fallthru
      _
    // Predicated region
    $region6: #{tpu_custom_call.1} parent=1 // pred_check
      _
    $region7: #{tpu_custom_call.1} parent=1 // pred_check_branch
      %20 = sbr.rel (0) target = $region9
    $region8: #{tpu_custom_call.1} parent=1 // pred_region
      _
    $region9: #{tpu_custom_call.1} parent=1 // pred_fallthru
      _
    // Predicated region
    $region10: #{tpu_custom_call.1} parent=1 // pred_check
      _
    $region11: #{tpu_custom_call.1} parent=1 // pred_check_branch
      %22 = sbr.rel (0) target = $region13
    $region12: #{tpu_custom_call.1} parent=1 // pred_region
      %23 = dma.done [#allocation3], 256
    $region13: #{tpu_custom_call.1} parent=1 // pred_fallthru
      _
    %v24 = vld [vmem:[#allocation2] sm:$0xff]
    %v25 = vld [vmem:[#allocation2 + $0x8] sm:$0xff]
    %v26 = vld [vmem:[%s1] sm:$0x3]
    %v27 = vmul.f32 %v26, 1.442695
    %v28 = vpow.pop %v27
    %v29 = vrcp.pop %v28
    %v30 = vmul.f32 1.0, %v29
    %v32 = vlaneseq
    %v33 = vshrl.u32 %v32, 7
    %v34 = vsub.s32 0, %v33
    %v35 = vrot.slane %v28, %v34
    %v36 = vlaneseq
    %v37 = vshrl.u32 %v36, 7
    %v38 = vsub.s32 1, %v37
    %v39 = vrot.slane %v28, %v38
    %v42 = vmul.f32 %v35, %v24
    %v43 = vmul.f32 %v39, %v25
    %v44 = vmin.f32 %v42, 11.512925
    %v45 = vmin.f32 %v43, 11.512925
    %v46 = vmul.f32 %v44, 1.442695
    %v47 = vpow.pop %v46
    %v48 = vmul.f32 %v45, 1.442695
    %v49 = vpow.pop %v48
    %v50 = vadd.f32 %v47, 1.0
    %v51 = vlog2.pop %v50
    %v52 = vmul.f32 %v51, 0.6931472
    %v53 = vmul.f32 -0.5, %v47
    %v54 = vadd.f32 %v53, 1.0
    %v55 = vmul.f32 %v54, %v47
    %v56 = vand.u32 2147483647, %v47
    %vm57 = vcmp.lt.f32.partialorder %v56, 0.0004427343
    %v58 = vsel %vm57, %v55, %v52
    %v59 = vadd.f32 %v49, 1.0
    %v60 = vlog2.pop %v59
    %v61 = vmul.f32 %v60, 0.6931472
    %v62 = vmul.f32 -0.5, %v49
    %v63 = vadd.f32 %v62, 1.0
    %v64 = vmul.f32 %v63, %v49
    %v65 = vand.u32 2147483647, %v49
    %vm66 = vcmp.lt.f32.partialorder %v65, 0.0004427343
    %v67 = vsel %vm66, %v64, %v61
    %v69 = vlaneseq
    %v70 = vshrl.u32 %v69, 7
    %v71 = vsub.s32 0, %v70
    %v72 = vrot.slane %v30, %v71
    %v73 = vlaneseq
    %v74 = vshrl.u32 %v73, 7
    %v75 = vsub.s32 1, %v74
    %v76 = vrot.slane %v30, %v75
    %v79 = vmul.f32 %v58, %v72
    %v80 = vmul.f32 %v67, %v76
    %vm81 = vcmp.le.f32.partialorder %v42, 20.0
    %vm82 = vcmp.le.f32.partialorder %v43, 20.0
    %v83 = vsel %vm81, %v79, %v24
    %v84 = vsel %vm82, %v80, %v25
    %85 = vst [vmem:[#allocation5] sm:$0xff] %v83
    %86 = vst [vmem:[#allocation5 + $0x8] sm:$0xff] %v84
    // Predicated region
    $region14: #{tpu_custom_call.1} parent=1 // pred_check
      _
    $region15: #{tpu_custom_call.1} parent=1 // pred_check_branch
      %88 = sbr.rel (0) target = $region17
    $region16: #{tpu_custom_call.1} parent=1 // pred_region
      %s90 = ssub.s32 256, 256
      %91 = vsyncadd [#allocation4], %s90
      %s93 = sshll.u32 [#allocation5], 4
      %s94 = int_to_ptr.vmem [resolvable:$true] %s93
      %96 = dma.vmem_to_hbm [thread:$0]  %s94, 256, %s2, [#allocation4]
    $region17: #{tpu_custom_call.1} parent=1 // pred_fallthru
      _
    // Predicated region
    $region18: #{tpu_custom_call.1} parent=1 // pred_check
      _
    $region19: #{tpu_custom_call.1} parent=1 // pred_check_branch
      %98 = sbr.rel (0) target = $region21
    $region20: #{tpu_custom_call.1} parent=1 // pred_region
      %99 = dma.done [#allocation4], 256
    $region21: #{tpu_custom_call.1} parent=1 // pred_fallthru
      _
    %100 = vsyncpa [#allocation3], 1
    %101 = vsyncpa [#allocation4], 1

</llo_original>
